<compile_context>
chip_gen: v7x
topology: tpu7x:2x2x1
jax: 0.10.0
libtpu: 0.0.40
codegen_flags: <defaults>
</compile_context>

<pallas_src>
import functools

import jax
import jax.numpy as jnp
from jax.experimental import pallas as pl
from jax.experimental.pallas import tpu as pltpu


# -----------------------------------------------------------------------------
# Kernel: one grid step == Bt batch rows x all C channels x TL pixels.
# -----------------------------------------------------------------------------
def _layernorm_kernel(x_ref, w_ref, b_ref, o_ref, *, eps, inv_c):
    # x_ref: (Bt, C, TL), w_ref/b_ref: (C, 1), o_ref: (Bt, C, TL)
    x = x_ref[...].astype(jnp.float32)
    # One pass over x: E[x] and E[x^2]; var = E[x^2] - mean^2.
    mean = jnp.sum(x, axis=1, keepdims=True) * inv_c          # (Bt, 1, TL)
    mean_sq = jnp.sum(x * x, axis=1, keepdims=True) * inv_c   # (Bt, 1, TL)
    var = jnp.maximum(mean_sq - mean * mean, 0.0)             # guard fp cancellation
    inv_std = jax.lax.rsqrt(var + eps)                        # EUP, not VPU
    w = w_ref[...].astype(jnp.float32)                        # (C, 1) -> bcast (Bt, C, TL)
    b = b_ref[...].astype(jnp.float32)
    o_ref[...] = (w * ((x - mean) * inv_std) + b).astype(o_ref.dtype)


# -----------------------------------------------------------------------------
# Wrapper: free NCHW -> (B, C, HW) reshape, block sizing, pallas_call.
# -----------------------------------------------------------------------------
def layer_norm(x, weight, bias, *, eps=1e-6, target_block_bytes=2 << 20,
               min_pallas_bytes=0):
    """Channel LayerNorm. x: (B, C, H, W); weight/bias broadcastable to (1, C, 1, 1).

    min_pallas_bytes: optional small-problem fallback threshold (bytes). 0
    disables the fallback so the Pallas kernel always runs.
    """
    B, C, H, W = x.shape
    L = H * W
    itemsize = jnp.dtype(x.dtype).itemsize

    # Optional tiny-problem fallback: at a few KB a plain XLA fusion wins.
    if x.size * itemsize < min_pallas_bytes:
        return _reference(x, weight, bias, eps)

    # Flatten pixels onto the lane axis (contiguous reshape -> no data movement).
    x2 = x.reshape(B, C, L)
    # Keep params in their native dtype (no precision-losing downcast).
    w2 = jnp.reshape(jnp.asarray(weight), (C, 1))
    b2 = jnp.reshape(jnp.asarray(bias), (C, 1))

    # --- Block sizing: aim for ~target_block_bytes of input per grid step. ---
    # TL must be a multiple of 128 (or the full L); Bt folds batch rows when
    # C*L alone is too small to amortize per-step overhead.
    row_bytes = C * itemsize
    tl_budget = max(128, (target_block_bytes // max(row_bytes, 1)) // 128 * 128)
    if L <= tl_budget:
        TL = L                                                 # full pixel row
        Bt = max(1, min(B, int(target_block_bytes // max(C * L * itemsize, 1))))
    else:
        TL = int(tl_budget)                                    # 128-multiple tile
        Bt = 1

    grid = (pl.cdiv(B, Bt), pl.cdiv(L, TL))                    # ragged blocks masked

    # VMEM need: double-buffered in+out blocks + f32 compute temporaries + slack.
    block_bytes = Bt * C * TL * itemsize
    f32_block = Bt * C * TL * 4
    vmem_limit = int(min(max(4 * block_bytes + 4 * f32_block + (1 << 20), 16 << 20),
                         48 << 20))

    kernel = functools.partial(_layernorm_kernel, eps=float(eps), inv_c=1.0 / C)

    out = pl.pallas_call(
        kernel,
        out_shape=jax.ShapeDtypeStruct((B, C, L), x.dtype),
        grid=grid,
        in_specs=[
            pl.BlockSpec((Bt, C, TL), lambda bi, ti: (bi, 0, ti)),
            pl.BlockSpec((C, 1), lambda bi, ti: (0, 0)),
            pl.BlockSpec((C, 1), lambda bi, ti: (0, 0)),
        ],
        out_specs=pl.BlockSpec((Bt, C, TL), lambda bi, ti: (bi, 0, ti)),
        compiler_params=pltpu.CompilerParams(
            dimension_semantics=("parallel", "parallel"),
            vmem_limit_bytes=vmem_limit),
    )(x2, w2, b2)

    return out.reshape(B, C, H, W)


# Plain-JAX reference with identical PyTorch semantics, for verification.
def _reference(x, weight, bias, eps=1e-6):
    u = jnp.mean(x, axis=1, keepdims=True)
    s = jnp.mean((x - u) ** 2, axis=1, keepdims=True)
    xn = (x - u) / jnp.sqrt(s + eps)
    return weight * xn + bias


if __name__ == "__main__":
    # Module default: shape=(1, 7, 1, 1), dim_index=1, eps=1e-6.
    B, C, H, W = 2, 7, 16, 16

    key = jax.random.PRNGKey(0)
    kx, kw, kb = jax.random.split(key, 3)
    x = jax.random.normal(kx, (B, C, H, W), jnp.float32)
    # nn.Parameter(torch.ones(shape)) / zeros(shape), perturbed so the affine
    # transform is actually exercised.
    weight = jnp.ones((1, C, 1, 1), jnp.float32) \
        + 0.1 * jax.random.normal(kw, (1, C, 1, 1), jnp.float32)
    bias = jnp.zeros((1, C, 1, 1), jnp.float32) \
        + 0.1 * jax.random.normal(kb, (1, C, 1, 1), jnp.float32)

    out = layer_norm(x, weight, bias)          # eps=1e-6 matches the module
    out = jax.block_until_ready(out)

    ref = _reference(x, weight, bias)
    assert out.shape == (B, C, H, W)
    err = float(jnp.max(jnp.abs(out - ref)))
    assert jnp.allclose(out, ref, rtol=1e-5, atol=1e-5), err

    print("KERNEL_OK")
</pallas_src>

<mosaic_0001>
module attributes {stable_mosaic.version = 11 : i64} {
  func.func @_layernorm_kernel(%arg0: i32, %arg1: i32, %arg2: memref<2x7x256xf32, #tpu.memory_space<vmem>>, %arg3: memref<7x1xf32, #tpu.memory_space<vmem>>, %arg4: memref<7x1xf32, #tpu.memory_space<vmem>>, %arg5: memref<2x7x256xf32, #tpu.memory_space<vmem>>) attributes {dimension_semantics = [#tpu.dimension_semantics<parallel>, #tpu.dimension_semantics<parallel>], iteration_bounds = array<i64: 1, 1>, scalar_prefetch = 0 : i64, scratch_operands = 0 : i64, tpu.core_type = #tpu.core_type<tc>, window_params = [{transform_indices = @transform_0, window_bounds = array<i64: 2, 7, 256>}, {pipeline_mode = #tpu.pipeline_mode<synchronous>, transform_indices = @transform_1, window_bounds = array<i64: 7, 1>}, {pipeline_mode = #tpu.pipeline_mode<synchronous>, transform_indices = @transform_2, window_bounds = array<i64: 7, 1>}, {transform_indices = @transform_3, window_bounds = array<i64: 2, 7, 256>}]} {
    %c0 = arith.constant 0 : index
    %c0_0 = arith.constant 0 : index
    %c0_1 = arith.constant 0 : index
    %0 = vector.load %arg2[%c0, %c0_0, %c0_1] : memref<2x7x256xf32, #tpu.memory_space<vmem>>, vector<2x7x256xf32>
    %cst = arith.constant dense<0.000000e+00> : vector<2x256xf32>
    %1 = vector.multi_reduction <add>, %0, %cst [1] : vector<2x7x256xf32> to vector<2x256xf32>
    %2 = vector.shape_cast %1 : vector<2x256xf32> to vector<2x1x256xf32>
    %cst_2 = arith.constant 0.142857149 : f32
    %3 = vector.broadcast %cst_2 : f32 to vector<2x1x256xf32>
    %4 = arith.mulf %2, %3 : vector<2x1x256xf32>
    %5 = arith.mulf %0, %0 : vector<2x7x256xf32>
    %cst_3 = arith.constant dense<0.000000e+00> : vector<2x256xf32>
    %6 = vector.multi_reduction <add>, %5, %cst_3 [1] : vector<2x7x256xf32> to vector<2x256xf32>
    %7 = vector.shape_cast %6 : vector<2x256xf32> to vector<2x1x256xf32>
    %cst_4 = arith.constant 0.142857149 : f32
    %8 = vector.broadcast %cst_4 : f32 to vector<2x1x256xf32>
    %9 = arith.mulf %7, %8 : vector<2x1x256xf32>
    %10 = arith.mulf %4, %4 : vector<2x1x256xf32>
    %11 = arith.subf %9, %10 : vector<2x1x256xf32>
    %cst_5 = arith.constant 0.000000e+00 : f32
    %12 = vector.broadcast %cst_5 : f32 to vector<2x1x256xf32>
    %13 = arith.maximumf %11, %12 : vector<2x1x256xf32>
    %cst_6 = arith.constant 9.99999997E-7 : f32
    %14 = vector.broadcast %cst_6 : f32 to vector<2x1x256xf32>
    %15 = arith.addf %13, %14 : vector<2x1x256xf32>
    %16 = math.rsqrt %15 : vector<2x1x256xf32>
    %c0_7 = arith.constant 0 : index
    %c0_8 = arith.constant 0 : index
    %17 = vector.load %arg3[%c0_7, %c0_8] : memref<7x1xf32, #tpu.memory_space<vmem>>, vector<7x1xf32>
    %c0_9 = arith.constant 0 : index
    %c0_10 = arith.constant 0 : index
    %18 = vector.load %arg4[%c0_9, %c0_10] : memref<7x1xf32, #tpu.memory_space<vmem>>, vector<7x1xf32>
    %19 = vector.broadcast %4 : vector<2x1x256xf32> to vector<2x7x256xf32>
    %20 = arith.subf %0, %19 : vector<2x7x256xf32>
    %21 = vector.broadcast %16 : vector<2x1x256xf32> to vector<2x7x256xf32>
    %22 = arith.mulf %20, %21 : vector<2x7x256xf32>
    %23 = vector.shape_cast %17 : vector<7x1xf32> to vector<1x7x1xf32>
    %24 = vector.broadcast %23 : vector<1x7x1xf32> to vector<2x7x256xf32>
    %25 = arith.mulf %24, %22 : vector<2x7x256xf32>
    %26 = vector.shape_cast %18 : vector<7x1xf32> to vector<1x7x1xf32>
    %27 = vector.broadcast %26 : vector<1x7x1xf32> to vector<2x7x256xf32>
    %28 = arith.addf %25, %27 : vector<2x7x256xf32>
    %c0_11 = arith.constant 0 : index
    %c0_12 = arith.constant 0 : index
    %c0_13 = arith.constant 0 : index
    %29 = vector.load %arg5[%c0_11, %c0_12, %c0_13] : memref<2x7x256xf32, #tpu.memory_space<vmem>>, vector<2x7x256xf32>
    tpu.vector_store %arg5[%c0_11, %c0_12, %c0_13], %28 {strides = array<i32>} : memref<2x7x256xf32, #tpu.memory_space<vmem>>, vector<2x7x256xf32>,
    return
  }
  func.func @transform_0(%arg0: i32, %arg1: i32) -> (i32, i32, i32) {
    %c0_i32 = arith.constant 0 : i32
    %c0_i32_0 = arith.constant 0 : i32
    return %arg0, %c0_i32, %arg1 : i32, i32, i32
  }
  func.func @transform_1(%arg0: i32, %arg1: i32) -> (i32, i32) {
    %c0_i32 = arith.constant 0 : i32
    %c0_i32_0 = arith.constant 0 : i32
    %c0_i32_1 = arith.constant 0 : i32
    return %c0_i32, %c0_i32_0 : i32, i32
  }
  func.func @transform_2(%arg0: i32, %arg1: i32) -> (i32, i32) {
    %c0_i32 = arith.constant 0 : i32
    %c0_i32_0 = arith.constant 0 : i32
    %c0_i32_1 = arith.constant 0 : i32
    return %c0_i32, %c0_i32_0 : i32, i32
  }
  func.func @transform_3(%arg0: i32, %arg1: i32) -> (i32, i32, i32) {
    %c0_i32 = arith.constant 0 : i32
    %c0_i32_0 = arith.constant 0 : i32
    return %arg0, %c0_i32, %arg1 : i32, i32, i32
  }
}

</mosaic_0001>

<llo_original>
// kernel: tpu_custom_call.1
$region0: #{tpu_custom_call.1}
  #allocation0 [shape = 'u32[]', space=smem, size = 0x4, offset = 0x4, fixed_abs, tag = 'smem constant byte address 0x4 - core index']
  #allocation1 [shape = 'u32[144,128]{1,0:T(1,128)}', space=vmem, size = 0x12000, scoped, tag = 'internal scratch']
  %s0 = inlined_call_operand.vmem [shape: f32[2,7,256], index: 0, kind: input, shape index: {}]
  %s1 = inlined_call_operand.vmem [shape: f32[7,1], index: 1, kind: input, shape index: {}]
  %s2 = inlined_call_operand.vmem [shape: f32[7,1], index: 2, kind: input, shape index: {}]
  %s3 = inlined_call_operand.vmem [shape: f32[2,7,256], index: 3, kind: output, shape index: {}]
  %s4 = sld [smem:[#allocation0]]
  $region22: #{tpu_custom_call.1} parent=0
    _
  %s6 = ssub.s32 1, %s4
  %s7 = scalar_select 0, %s6, %s4
  // Predicated region
  $region2: #{tpu_custom_call.1} parent=0 // pred_check
    _
  $region3: #{tpu_custom_call.1} parent=0 // pred_check_branch
    %9 = sbr.rel (0) target = $region5
  $region4: #{tpu_custom_call.1} parent=0 // pred_region
    _
  $region5: #{tpu_custom_call.1} parent=0 // pred_fallthru
    _
  // Predicated region
  $region6: #{tpu_custom_call.1} parent=0 // pred_check
    _
  $region7: #{tpu_custom_call.1} parent=0 // pred_check_branch
    %11 = sbr.rel (0) target = $region9
  $region8: #{tpu_custom_call.1} parent=0 // pred_region
    _
  $region9: #{tpu_custom_call.1} parent=0 // pred_fallthru
    _
  // Predicated region
  $region10: #{tpu_custom_call.1} parent=0 // pred_check
    _
  $region11: #{tpu_custom_call.1} parent=0 // pred_check_branch
    %13 = sbr.rel (0) target = $region13
  $region12: #{tpu_custom_call.1} parent=0 // pred_region
    _
  $region13: #{tpu_custom_call.1} parent=0 // pred_fallthru
    _
  %v14 = vld [vmem:[%s0] sm:$0x7f]
  %v15 = vld [vmem:[%s0 + $0x8] sm:$0x7f]
  %v16 = vld [vmem:[%s0 + $0x10] sm:$0x7f]
  %v17 = vld [vmem:[%s0 + $0x18] sm:$0x7f]
  %vm18 = vcmask 1046528
  %v19 = vsel %vm18, %v14, 0.0
  %v20 = vrot.slane %v19, 4
  %v21 = vadd.f32 %v19, %v20
  %v22 = vrot.slane %v21, 2
  %v23 = vadd.f32 %v21, %v22
  %v24 = vrot.slane %v23, 1
  %v25 = vadd.f32 %v23, %v24
  %v26 = vsel %vm18, %v15, 0.0
  %v27 = vrot.slane %v26, 4
  %v28 = vadd.f32 %v26, %v27
  %v29 = vrot.slane %v28, 2
  %v30 = vadd.f32 %v28, %v29
  %v31 = vrot.slane %v30, 1
  %v32 = vadd.f32 %v30, %v31
  %v33 = vsel %vm18, %v16, 0.0
  %v34 = vrot.slane %v33, 4
  %v35 = vadd.f32 %v33, %v34
  %v36 = vrot.slane %v35, 2
  %v37 = vadd.f32 %v35, %v36
  %v38 = vrot.slane %v37, 1
  %v39 = vadd.f32 %v37, %v38
  %v40 = vsel %vm18, %v17, 0.0
  %v41 = vrot.slane %v40, 4
  %v42 = vadd.f32 %v40, %v41
  %v43 = vrot.slane %v42, 2
  %v44 = vadd.f32 %v42, %v43
  %v45 = vrot.slane %v44, 1
  %v46 = vadd.f32 %v44, %v45
  %v47 = vmul.f32 %v25, 0.14285715
  %v48 = vmul.f32 %v32, 0.14285715
  %v49 = vmul.f32 %v39, 0.14285715
  %v50 = vmul.f32 %v46, 0.14285715
  %v51 = vmul.f32 %v14, %v14
  %v52 = vmul.f32 %v15, %v15
  %v53 = vmul.f32 %v16, %v16
  %v54 = vmul.f32 %v17, %v17
  %v55 = vsel %vm18, %v51, 0.0
  %v56 = vrot.slane %v55, 4
  %v57 = vadd.f32 %v55, %v56
  %v58 = vrot.slane %v57, 2
  %v59 = vadd.f32 %v57, %v58
  %v60 = vrot.slane %v59, 1
  %v61 = vadd.f32 %v59, %v60
  %v62 = vsel %vm18, %v52, 0.0
  %v63 = vrot.slane %v62, 4
  %v64 = vadd.f32 %v62, %v63
  %v65 = vrot.slane %v64, 2
  %v66 = vadd.f32 %v64, %v65
  %v67 = vrot.slane %v66, 1
  %v68 = vadd.f32 %v66, %v67
  %v69 = vsel %vm18, %v53, 0.0
  %v70 = vrot.slane %v69, 4
  %v71 = vadd.f32 %v69, %v70
  %v72 = vrot.slane %v71, 2
  %v73 = vadd.f32 %v71, %v72
  %v74 = vrot.slane %v73, 1
  %v75 = vadd.f32 %v73, %v74
  %v76 = vsel %vm18, %v54, 0.0
  %v77 = vrot.slane %v76, 4
  %v78 = vadd.f32 %v76, %v77
  %v79 = vrot.slane %v78, 2
  %v80 = vadd.f32 %v78, %v79
  %v81 = vrot.slane %v80, 1
  %v82 = vadd.f32 %v80, %v81
  %v83 = vmul.f32 %v61, 0.14285715
  %v84 = vmul.f32 %v68, 0.14285715
  %v85 = vmul.f32 %v75, 0.14285715
  %v86 = vmul.f32 %v82, 0.14285715
  %v87 = vmul.f32 %v47, %v47
  %v88 = vmul.f32 %v48, %v48
  %v89 = vmul.f32 %v49, %v49
  %v90 = vmul.f32 %v50, %v50
  %v91 = vsub.f32 %v83, %v87
  %v92 = vsub.f32 %v84, %v88
  %v93 = vsub.f32 %v85, %v89
  %v94 = vsub.f32 %v86, %v90
  %v95 = vmax.f32 %v91, 0.0
  %v96 = vmax.f32 %v92, 0.0
  %v97 = vmax.f32 %v93, 0.0
  %v98 = vmax.f32 %v94, 0.0
  %v99 = vadd.f32 %v95, 1e-06
  %v100 = vadd.f32 %v96, 1e-06
  %v101 = vadd.f32 %v97, 1e-06
  %v102 = vadd.f32 %v98, 1e-06
  %v103 = vrsqrt.pop %v99
  %v104 = vrsqrt.pop %v100
  %v105 = vrsqrt.pop %v101
  %v106 = vrsqrt.pop %v102
  %v107 = vld [vmem:[%s1] sm:$0x7f]
  %v108 = vld [vmem:[%s2] sm:$0x7f]
  %v109 = vsub.f32 %v14, %v47
  %v110 = vsub.f32 %v15, %v48
  %v111 = vsub.f32 %v16, %v49
  %v112 = vsub.f32 %v17, %v50
  %v113 = vmul.f32 %v109, %v103
  %v114 = vmul.f32 %v110, %v104
  %v115 = vmul.f32 %v111, %v105
  %v116 = vmul.f32 %v112, %v106
  %118 = vset.pattern.permute.xlu0 0
  %119 = vperm.xlu0 %118, %v107
  %v120 = vpop.permute.xlu0 %119
  %v122 = vmul.f32 %v120, %v113
  %v123 = vmul.f32 %v120, %v114
  %v124 = vmul.f32 %v120, %v115
  %v125 = vmul.f32 %v120, %v116
  %127 = vset.pattern.permute.xlu0 0
  %128 = vperm.xlu0 %127, %v108
  %v129 = vpop.permute.xlu0 %128
  %v131 = vadd.f32 %v122, %v129
  %v132 = vadd.f32 %v123, %v129
  %v133 = vadd.f32 %v124, %v129
  %v134 = vadd.f32 %v125, %v129
  %135 = vst [vmem:[%s3] sm:$0x7f] %v131
  %136 = vst [vmem:[%s3 + $0x8] sm:$0x7f] %v132
  %137 = vst [vmem:[%s3 + $0x10] sm:$0x7f] %v133
  %138 = vst [vmem:[%s3 + $0x18] sm:$0x7f] %v134
  // Predicated region
  $region14: #{tpu_custom_call.1} parent=0 // pred_check
    _
  $region15: #{tpu_custom_call.1} parent=0 // pred_check_branch
    %140 = sbr.rel (0) target = $region17
  $region16: #{tpu_custom_call.1} parent=0 // pred_region
    _
  $region17: #{tpu_custom_call.1} parent=0 // pred_fallthru
    _
  // Predicated region
  $region18: #{tpu_custom_call.1} parent=0 // pred_check
    _
  $region19: #{tpu_custom_call.1} parent=0 // pred_check_branch
    %142 = sbr.rel (0) target = $region21
  $region20: #{tpu_custom_call.1} parent=0 // pred_region
    _
  $region21: #{tpu_custom_call.1} parent=0 // pred_fallthru
    _

</llo_original>
